<compile_context>
chip_gen: v7x
topology: tpu7x:2x2x1
jax: 0.10.0
libtpu: 0.0.40
codegen_flags: <defaults>
</compile_context>

<pallas_src>
import functools

import jax
import jax.numpy as jnp
from jax.experimental import pallas as pl
from jax.experimental.pallas import tpu as pltpu


# Per-grid-step budget for the (input + output) block, before double-buffering.
# Kept modest so double-buffered blocks fit comfortably inside the default
# scoped-VMEM limit on all generations (v5e/v6e: 128 MiB phys, v7x: 64 MiB).
_TARGET_BLOCK_BYTES = 4 * 1024 * 1024

# Below this total problem size the kernel is pure fixed overhead; fall back
# to XLA's fused pad unless the caller forces the Pallas path.
_SMALL_FALLBACK_BYTES = 256 * 1024


def _pad_kernel(x_ref, o_ref, *, left, right, top, bottom):
    """Replication-pad a (TC, H, W) block into a (TC, Ho, Wo) block."""
    tc, H, W = x_ref.shape
    _, Ho, Wo = o_ref.shape

    # ---- middle band (rows top .. top+H): interior + left/right strips ----
    # Single write-once copy of the interior (no intermediates).
    o_ref[:, top:top + H, left:left + W] = x_ref[...]
    if left > 0:
        # Lane broadcast of the first column -> one VPU broadcast, one store.
        o_ref[:, top:top + H, :left] = jnp.broadcast_to(
            x_ref[:, :, 0:1], (tc, H, left))
    if right > 0:
        o_ref[:, top:top + H, left + W:] = jnp.broadcast_to(
            x_ref[:, :, W - 1:W], (tc, H, right))

    # ---- top / bottom bands: replicate the already width-padded edge rows ----
    # Reading back the edge row of o_ref keeps these stores full-width
    # (lane-dense), including the corners, with a single store per band.
    if top > 0:
        edge = o_ref[:, top:top + 1, :]                  # (tc, 1, Wo)
        o_ref[:, :top, :] = jnp.broadcast_to(edge, (tc, top, Wo))
    if bottom > 0:
        edge = o_ref[:, top + H - 1:top + H, :]          # (tc, 1, Wo)
        o_ref[:, top + H:, :] = jnp.broadcast_to(edge, (tc, bottom, Wo))


def replication_pad2d_naive(x, padding, *, force_pallas=False):
    """JAX/Pallas equivalent of nunif's replication_pad2d_naive.

    x: (N, C, H, W) array; padding: (left, right, top, bottom) python ints.
    """
    assert x.ndim == 4 and len(padding) == 4
    left, right, top, bottom = (int(p) for p in padding)
    assert min(left, right, top, bottom) >= 0

    N, C, H, W = x.shape
    Ho = H + top + bottom
    Wo = W + left + right

    if (left, right, top, bottom) == (0, 0, 0, 0):
        return x

    NC = N * C
    itemsize = jnp.dtype(x.dtype).itemsize
    plane_bytes = (H * W + Ho * Wo) * itemsize  # in + out bytes per plane

    # Tiny problems: XLA's fused edge-pad beats a kernel dominated by
    # per-call / per-grid-step overhead.
    if not force_pallas and NC * plane_bytes < _SMALL_FALLBACK_BYTES:
        return jnp.pad(
            x, ((0, 0), (0, 0), (top, bottom), (left, right)), mode="edge")

    # ---- choose how many channel planes per grid step (TC) ----------------
    # Pure HBM-bandwidth op: make DMAs as large as the VMEM budget allows,
    # but keep >= 2 grid steps so v7x can shard the parallel axis over its
    # two TensorCores.
    tc = max(1, min(NC, _TARGET_BLOCK_BYTES // max(1, plane_bytes)))
    if NC >= 2:
        tc = min(tc, pl.cdiv(NC, 2))
    grid = (pl.cdiv(NC, tc),)

    # Double-buffered in+out blocks (+ headroom); capped at v7x physical VMEM.
    block_bytes = 2 * tc * plane_bytes
    vmem_limit = int(min(64 << 20, max(32 << 20, block_bytes + (4 << 20))))
    # TODO(synk): for planes whose in+out block itself exceeds the VMEM budget
    # (e.g. >2k x 2k f32), add a row-tiled grid axis with pl.when-gated
    # top/bottom replication on the first/last row tile.

    x2 = x.reshape(NC, H, W)
    kernel = functools.partial(
        _pad_kernel, left=left, right=right, top=top, bottom=bottom)

    out = pl.pallas_call(
        kernel,
        out_shape=jax.ShapeDtypeStruct((NC, Ho, Wo), x.dtype),
        grid=grid,
        in_specs=[pl.BlockSpec((tc, H, W), lambda i: (i, 0, 0))],
        out_specs=pl.BlockSpec((tc, Ho, Wo), lambda i: (i, 0, 0)),
        compiler_params=pltpu.CompilerParams(
            dimension_semantics=("parallel",),
            vmem_limit_bytes=vmem_limit,
        ),
        cost_estimate=pl.CostEstimate(
            flops=0,
            transcendentals=0,
            bytes_accessed=NC * plane_bytes,
        ),
    )(x2)

    return out.reshape(N, C, Ho, Wo)


class ReplicationPad2dNaive:
    """Mirror of the PyTorch module; holds static padding, forward calls kernel."""

    def __init__(self, padding, force_pallas=False):
        assert isinstance(padding, (list, tuple)) and len(padding) == 4
        self.padding = tuple(int(p) for p in padding)
        self.force_pallas = force_pallas

    def __call__(self, x):
        return replication_pad2d_naive(
            x, self.padding, force_pallas=self.force_pallas)


if __name__ == "__main__":
    key = jax.random.PRNGKey(0)
    # Small shape consistent with the module's 4D NCHW assumption.
    N, C, H, W = 2, 4, 16, 16
    x = jax.random.normal(key, (N, C, H, W), dtype=jnp.float32)

    padding = (3, 2, 1, 4)  # (left, right, top, bottom)
    left, right, top, bottom = padding
    ref = jnp.pad(x, ((0, 0), (0, 0), (top, bottom), (left, right)), mode="edge")

    # Exercise the Pallas kernel path explicitly (shape here is tiny, so the
    # default path would take the XLA fallback).
    module = ReplicationPad2dNaive(padding, force_pallas=True)
    out = jax.block_until_ready(module(x))

    assert out.shape == (N, C, H + top + bottom, W + left + right), out.shape
    assert out.dtype == x.dtype
    assert jnp.array_equal(out, ref), "mismatch vs reference replication pad"

    # Second config with zero pads on some sides, still through the kernel.
    padding2 = (0, 5, 2, 0)
    ref2 = jnp.pad(x, ((0, 0), (0, 0), (padding2[2], padding2[3]),
                       (padding2[0], padding2[1])), mode="edge")
    out2 = jax.block_until_ready(
        ReplicationPad2dNaive(padding2, force_pallas=True)(x))
    assert jnp.array_equal(out2, ref2), "mismatch (zero-side padding case)"

    # Default path (auto small-plane fallback) must agree as well.
    out3 = jax.block_until_ready(ReplicationPad2dNaive(padding)(x))
    assert jnp.array_equal(out3, ref), "mismatch on fallback path"

    print("KERNEL_OK")
</pallas_src>

<mosaic_0001>
module attributes {stable_mosaic.version = 11 : i64} {
  func.func @_pad_kernel(%arg0: i32, %arg1: memref<4x16x16xf32, #tpu.memory_space<vmem>>, %arg2: memref<4x21x21xf32, #tpu.memory_space<vmem>>) attributes {dimension_semantics = [#tpu.dimension_semantics<parallel>], iteration_bounds = array<i64: 2>, scalar_prefetch = 0 : i64, scratch_operands = 0 : i64, tpu.core_type = #tpu.core_type<tc>, window_params = [{transform_indices = @transform_0, window_bounds = array<i64: 4, 16, 16>}, {transform_indices = @transform_1, window_bounds = array<i64: 4, 21, 21>}]} {
    %c0 = arith.constant 0 : index
    %c0_0 = arith.constant 0 : index
    %c0_1 = arith.constant 0 : index
    %0 = vector.load %arg1[%c0, %c0_0, %c0_1] : memref<4x16x16xf32, #tpu.memory_space<vmem>>, vector<4x16x16xf32>
    %c0_2 = arith.constant 0 : index
    %c1 = arith.constant 1 : index
    %c3 = arith.constant 3 : index
    %1 = vector.load %arg2[%c0_2, %c1, %c3] : memref<4x21x21xf32, #tpu.memory_space<vmem>>, vector<4x16x16xf32>
    tpu.vector_store %arg2[%c0_2, %c1, %c3], %0 {strides = array<i32>} : memref<4x21x21xf32, #tpu.memory_space<vmem>>, vector<4x16x16xf32>,
    %c0_3 = arith.constant 0 : index
    %c0_4 = arith.constant 0 : index
    %c0_5 = arith.constant 0 : index
    %2 = vector.load %arg1[%c0_3, %c0_4, %c0_5] : memref<4x16x16xf32, #tpu.memory_space<vmem>>, vector<4x16x1xf32>
    %3 = vector.shape_cast %2 : vector<4x16x1xf32> to vector<4x16x1xf32>
    %4 = vector.broadcast %3 : vector<4x16x1xf32> to vector<4x16x3xf32>
    %c0_6 = arith.constant 0 : index
    %c1_7 = arith.constant 1 : index
    %c0_8 = arith.constant 0 : index
    %5 = vector.load %arg2[%c0_6, %c1_7, %c0_8] : memref<4x21x21xf32, #tpu.memory_space<vmem>>, vector<4x16x3xf32>
    tpu.vector_store %arg2[%c0_6, %c1_7, %c0_8], %4 {strides = array<i32>} : memref<4x21x21xf32, #tpu.memory_space<vmem>>, vector<4x16x3xf32>,
    %c0_9 = arith.constant 0 : index
    %c0_10 = arith.constant 0 : index
    %c15 = arith.constant 15 : index
    %6 = vector.load %arg1[%c0_9, %c0_10, %c15] : memref<4x16x16xf32, #tpu.memory_space<vmem>>, vector<4x16x1xf32>
    %7 = vector.shape_cast %6 : vector<4x16x1xf32> to vector<4x16x1xf32>
    %8 = vector.broadcast %7 : vector<4x16x1xf32> to vector<4x16x2xf32>
    %c0_11 = arith.constant 0 : index
    %c1_12 = arith.constant 1 : index
    %c19 = arith.constant 19 : index
    %9 = vector.load %arg2[%c0_11, %c1_12, %c19] : memref<4x21x21xf32, #tpu.memory_space<vmem>>, vector<4x16x2xf32>
    tpu.vector_store %arg2[%c0_11, %c1_12, %c19], %8 {strides = array<i32>} : memref<4x21x21xf32, #tpu.memory_space<vmem>>, vector<4x16x2xf32>,
    %c0_13 = arith.constant 0 : index
    %c1_14 = arith.constant 1 : index
    %c0_15 = arith.constant 0 : index
    %10 = vector.load %arg2[%c0_13, %c1_14, %c0_15] : memref<4x21x21xf32, #tpu.memory_space<vmem>>, vector<4x1x21xf32>
    %c0_16 = arith.constant 0 : index
    %c0_17 = arith.constant 0 : index
    %c0_18 = arith.constant 0 : index
    %11 = vector.load %arg2[%c0_16, %c0_17, %c0_18] : memref<4x21x21xf32, #tpu.memory_space<vmem>>, vector<4x1x21xf32>
    tpu.vector_store %arg2[%c0_16, %c0_17, %c0_18], %10 {strides = array<i32>} : memref<4x21x21xf32, #tpu.memory_space<vmem>>, vector<4x1x21xf32>,
    %c0_19 = arith.constant 0 : index
    %c16 = arith.constant 16 : index
    %c0_20 = arith.constant 0 : index
    %12 = vector.load %arg2[%c0_19, %c16, %c0_20] : memref<4x21x21xf32, #tpu.memory_space<vmem>>, vector<4x1x21xf32>
    %13 = vector.shape_cast %12 : vector<4x1x21xf32> to vector<4x1x21xf32>
    %14 = vector.broadcast %13 : vector<4x1x21xf32> to vector<4x4x21xf32>
    %c0_21 = arith.constant 0 : index
    %c17 = arith.constant 17 : index
    %c0_22 = arith.constant 0 : index
    %15 = vector.load %arg2[%c0_21, %c17, %c0_22] : memref<4x21x21xf32, #tpu.memory_space<vmem>>, vector<4x4x21xf32>
    tpu.vector_store %arg2[%c0_21, %c17, %c0_22], %14 {strides = array<i32>} : memref<4x21x21xf32, #tpu.memory_space<vmem>>, vector<4x4x21xf32>,
    return
  }
  func.func @transform_0(%arg0: i32) -> (i32, i32, i32) {
    %c0_i32 = arith.constant 0 : i32
    %c0_i32_0 = arith.constant 0 : i32
    %c0_i32_1 = arith.constant 0 : i32
    return %arg0, %c0_i32, %c0_i32_0 : i32, i32, i32
  }
  func.func @transform_1(%arg0: i32) -> (i32, i32, i32) {
    %c0_i32 = arith.constant 0 : i32
    %c0_i32_0 = arith.constant 0 : i32
    %c0_i32_1 = arith.constant 0 : i32
    return %arg0, %c0_i32, %c0_i32_0 : i32, i32, i32
  }
}

</mosaic_0001>

<llo_original>
// kernel: tpu_custom_call.1
$region0: #{tpu_custom_call.1}
  #allocation0 [shape = 'u32[]', space=smem, size = 0x4, offset = 0x4, fixed_abs, tag = 'smem constant byte address 0x4 - core index']
  #allocation1 [shape = 'u32[144,128]{1,0:T(1,128)}', space=vmem, size = 0x12000, scoped, tag = 'internal scratch']
  %s0 = inlined_call_operand.hbm [shape: f32[8,16,16], index: 0, kind: input, shape index: {}]
  %s1 = inlined_call_operand.vmem [shape: f32[8,21,21], index: 1, kind: output, shape index: {}]
  %s2 = sld [smem:[#allocation0]]
  $region41: #{tpu_custom_call.1} parent=0
    _
  %s4 = ssub.s32 1, %s2
  %s5 = scalar_select 0, %s4, %s2
  $region1: #{tpu_custom_call.1} parent=0
    #allocation2 [shape = 'u8[65536]{0}', space=vmem, size = 0x10000, scoped, tag = 'input window, operand 0']
    #allocation3 [shape = 's32[2]{0}', space=sflag, size = 0x8, scoped, tag = 'scoped memory for tpu_custom_call.1']
    %6 = vsyncpa [#allocation3], 0
    %s7 = scalar_lea.sflag [#allocation3], 1
    %8 = vsyncpa %s7, 0
    loop: start=0, step=1, limit=4
    $region2: #{tpu_custom_call.1} parent=1 // loop_pre_header
      _
    $region3: #{tpu_custom_call.1} parent=1 // loop_header
      %s10 = sphi 0, %s14
      %p11 = scmp.ge.s32.totalorder %s10, 4
      %s20 = sphi 0, %s22
      %s23 = sphi 0, %s20
      %s24 = sphi 0, %s23
      %s40 = sphi 0, %s24
      %s46 = sphi 0, %s48
      %s49 = sphi 0, %s46
      %s50 = sphi 0, %s49
      %s66 = sphi 0, %s50
    $region4: #{tpu_custom_call.1} parent=1 // loop_header_branch
      %13 = sbr.rel (%p11) target = $region8
    $region5: #{tpu_custom_call.1} parent=1 // loop_body
      %s15 = ssub.s32 %s10, 1
      %s16 = ssub.s32 %s10, 2
      %s17 = sadd.s32 %s10, 1
      %s18 = ssub.s32 %s10, %s17
      %p19 = scmp.eq.s32.totalorder %s18, 0
      %s21 = sadd.s32 %s20, 1
      %s22 = scalar_select %p19, %s20, %s21
      %p25 = pneg %p19
      %p26 = scmp.eq.s32.totalorder %s10, 1
      %p27 = por %p25, %p26
      %p28 = scmp.ne.s32.totalorder %s20, %s23
      %p29 = scmp.eq.s32.totalorder %s10, 0
      %p30 = por %p28, %p29
      %p31 = scmp.ne.s32.totalorder %s20, %s23
      %p32 = scmp.eq.s32.totalorder %s15, 1
      %p33 = por %p31, %p32
      %p34 = scmp.ne.s32.totalorder %s23, %s24
      %p35 = scmp.eq.s32.totalorder %s15, 0
      %p36 = por %p34, %p35
      %p37 = scmp.ne.s32.totalorder %s23, %s24
      %p38 = scmp.eq.s32.totalorder %s16, 1
      %p39 = por %p37, %p38
      %p41 = scmp.ne.s32.totalorder %s24, %s40
      %p42 = scmp.eq.s32.totalorder %s16, 0
      %p43 = por %p41, %p42
      %s44 = ssub.s32 %s10, %s17
      %p45 = scmp.eq.s32.totalorder %s44, 0
      %s47 = sadd.s32 %s46, 1
      %s48 = scalar_select %p45, %s46, %s47
      %p51 = pneg %p45
      %p52 = scmp.eq.s32.totalorder %s10, 1
      %p53 = por %p51, %p52
      %p54 = scmp.ne.s32.totalorder %s46, %s49
      %p55 = scmp.eq.s32.totalorder %s10, 0
      %p56 = por %p54, %p55
      %p57 = scmp.ne.s32.totalorder %s46, %s49
      %p58 = scmp.eq.s32.totalorder %s15, 1
      %p59 = por %p57, %p58
      %p60 = scmp.ne.s32.totalorder %s49, %s50
      %p61 = scmp.eq.s32.totalorder %s15, 0
      %p62 = por %p60, %p61
      %p63 = scmp.ne.s32.totalorder %s49, %s50
      %p64 = scmp.eq.s32.totalorder %s16, 1
      %p65 = por %p63, %p64
      %p67 = scmp.ne.s32.totalorder %s50, %s66
      %p68 = scmp.eq.s32.totalorder %s16, 0
      %p69 = por %p67, %p68
      %p70 = scmp.le.s32.totalorder 1, %s10
      %p71 = scmp.lt.s32.totalorder %s10, 3
      %p72 = pnand %p70, %p71
      %p73 = pneg %p72
      // Predicated region
      $region9: #{tpu_custom_call.1} parent=5 // pred_check
        _
      $region10: #{tpu_custom_call.1} parent=5 // pred_check_branch
        %75 = sbr.rel (%p72) target = $region12
      $region11: #{tpu_custom_call.1} parent=5 // pred_region
        %s76 = ssub.s32 %s10, 1
      $region12: #{tpu_custom_call.1} parent=5 // pred_fallthru
        _
      %p77 = scmp.lt.s32.totalorder %s10, 2
      // Predicated region
      $region13: #{tpu_custom_call.1} parent=5 // pred_check
        %p78 = pneg %p77
      $region14: #{tpu_custom_call.1} parent=5 // pred_check_branch
        %80 = sbr.rel (%p78) target = $region16
      $region15: #{tpu_custom_call.1} parent=5 // pred_region
        // Predicated region
        $region17: #{tpu_custom_call.1} parent=15 // pred_check
          %p81 = pneg %p30
        $region18: #{tpu_custom_call.1} parent=15 // pred_check_branch
          %83 = sbr.rel (%p81) target = $region20
        $region19: #{tpu_custom_call.1} parent=15 // pred_region
          %s84 = sand.u32 %s20, 1
          %s85 = scalar_lea.sflag [#allocation3], %s84
          %s86 = sand.u32 %s20, 1
          %s87 = smul.addr %s86, 64
          %s88 = scalar_lea.vmem [#allocation2], %s87
          %s89 = smul.u32 4, %s10
          %s91 = ssub.s32 1024, 1024
          %92 = vsyncadd %s85, %s91
          %s93 = smul.addr %s89, 2
          %s94 = smul.addr %s93, 128
          %s95 = scalar_lea.hbm %s0, %s94
          %s96 = sshll.u32 %s88, 4
          %s97 = int_to_ptr.vmem [resolvable:$true] %s96
          %102 = dma.hbm_to_vmem [thread:$0]  %s95, 1024, %s97, %s85, 128, 128, 8
        $region20: #{tpu_custom_call.1} parent=15 // pred_fallthru
          _
      $region16: #{tpu_custom_call.1} parent=5 // pred_fallthru
        _
      %p103 = scmp.le.s32.totalorder 1, %s10
      %p104 = scmp.lt.s32.totalorder %s10, 3
      %p105 = pnand %p103, %p104
      %p106 = pneg %p105
      // Predicated region
      $region21: #{tpu_custom_call.1} parent=5 // pred_check
        _
      $region22: #{tpu_custom_call.1} parent=5 // pred_check_branch
        %108 = sbr.rel (%p105) target = $region24
      $region23: #{tpu_custom_call.1} parent=5 // pred_region
        %s109 = ssub.s32 %s10, 1
        %s110 = sand.u32 %s23, 1
        %s111 = scalar_lea.sflag [#allocation3], %s110
        %s112 = sand.u32 %s23, 1
        %s113 = smul.addr %s112, 64
        %s114 = scalar_lea.vmem [#allocation2], %s113
        // Predicated region
        $region25: #{tpu_custom_call.1} parent=23 // pred_check
          %p115 = pneg %p36
        $region26: #{tpu_custom_call.1} parent=23 // pred_check_branch
          %117 = sbr.rel (%p115) target = $region28
        $region27: #{tpu_custom_call.1} parent=23 // pred_region
          %118 = dma.done %s111, 1024
        $region28: #{tpu_custom_call.1} parent=23 // pred_fallthru
          _
        %s119 = sand.u32 %s23, 1
        %s120 = scalar_lea.sflag [#allocation3], %s119
        %s121 = sand.u32 %s23, 1
        %s122 = smul.addr %s121, 64
        %s123 = scalar_lea.vmem [#allocation2], %s122
        %p124 = pneg %p36
        %p125 = pneg %p33
        %p126 = pneg %p62
        %p127 = pneg %p59
        %s128 = smul.u32 4, %s15
        %p129 = scmp.lt.s32.totalorder %s128, 7
        %s130 = scalar_select %p129, %s128, 7
        %s131 = smul.addr %s130, 3
        %s132 = smul.addr %s131, 8
        %s133 = scalar_lea.vmem %s1, %s132
        %s134 = smul.u32 4, %s15
        %s135 = smul.u32 4, %s15
        %p136 = scmp.lt.s32.totalorder %s135, 7
        %s137 = scalar_select %p136, %s135, 7
        %s138 = smul.addr %s137, 3
        %s139 = smul.addr %s138, 8
        %s140 = scalar_lea.vmem %s1, %s139
        %s141 = smul.u32 4, %s15
        %v142 = vld [vmem:[%s114] sm:$0xff]
        %v143 = vld [vmem:[%s114 + $0x8] sm:$0xff]
        %v144 = vld [vmem:[%s114 + $0x10] sm:$0xff]
        %v145 = vld [vmem:[%s114 + $0x18] sm:$0xff]
        %v146 = vld [vmem:[%s114 + $0x20] sm:$0xff]
        %v147 = vld [vmem:[%s114 + $0x28] sm:$0xff]
        %v148 = vld [vmem:[%s114 + $0x30] sm:$0xff]
        %v149 = vld [vmem:[%s114 + $0x38] sm:$0xff]
        %158 = vrot.lane.b32.xlu0 %v142, 3
        %v159 = vpop.permute.xlu0 %158
        %160 = vrot.lane.b32.xlu0 %v143, 3
        %v161 = vpop.permute.xlu0 %160
        %162 = vrot.lane.b32.xlu0 %v144, 3
        %v163 = vpop.permute.xlu0 %162
        %164 = vrot.lane.b32.xlu0 %v145, 3
        %v165 = vpop.permute.xlu0 %164
        %166 = vrot.lane.b32.xlu0 %v146, 3
        %v167 = vpop.permute.xlu0 %166
        %168 = vrot.lane.b32.xlu0 %v147, 3
        %v169 = vpop.permute.xlu0 %168
        %170 = vrot.lane.b32.xlu0 %v148, 3
        %v171 = vpop.permute.xlu0 %170
        %172 = vrot.lane.b32.xlu0 %v149, 3
        %v173 = vpop.permute.xlu0 %172
        %vm182 = vcmask 154648
        %183 = vst.msk [vmem:[%s140 + $0x1] sm:$0xff] %vm182, %v159
        %184 = vst.msk [vmem:[%s140 + $0x9] sm:$0xff] %vm182, %v161
        %185 = vst.msk [vmem:[%s140 + $0x19] sm:$0xff] %vm182, %v163
        %186 = vst.msk [vmem:[%s140 + $0x21] sm:$0xff] %vm182, %v165
        %187 = vst.msk [vmem:[%s140 + $0x31] sm:$0xff] %vm182, %v167
        %188 = vst.msk [vmem:[%s140 + $0x39] sm:$0xff] %vm182, %v169
        %189 = vst.msk [vmem:[%s140 + $0x49] sm:$0xff] %vm182, %v171
        %190 = vst.msk [vmem:[%s140 + $0x51] sm:$0xff] %vm182, %v173
        %v191 = vld [vmem:[%s114] sm:$0xff]
        %v192 = vld [vmem:[%s114 + $0x8] sm:$0xff]
        %v193 = vld [vmem:[%s114 + $0x10] sm:$0xff]
        %v194 = vld [vmem:[%s114 + $0x18] sm:$0xff]
        %v195 = vld [vmem:[%s114 + $0x20] sm:$0xff]
        %v196 = vld [vmem:[%s114 + $0x28] sm:$0xff]
        %v197 = vld [vmem:[%s114 + $0x30] sm:$0xff]
        %v198 = vld [vmem:[%s114 + $0x38] sm:$0xff]
        %200 = vset.pattern.permute.xlu0 0
        %201 = vperm.xlu0 %200, %v191
        %v202 = vpop.permute.xlu0 %201
        %205 = vset.pattern.permute.xlu0 0
        %206 = vperm.xlu0 %205, %v192
        %v207 = vpop.permute.xlu0 %206
        %210 = vset.pattern.permute.xlu0 0
        %211 = vperm.xlu0 %210, %v193
        %v212 = vpop.permute.xlu0 %211
        %215 = vset.pattern.permute.xlu0 0
        %216 = vperm.xlu0 %215, %v194
        %v217 = vpop.permute.xlu0 %216
        %220 = vset.pattern.permute.xlu0 0
        %221 = vperm.xlu0 %220, %v195
        %v222 = vpop.permute.xlu0 %221
        %225 = vset.pattern.permute.xlu0 0
        %226 = vperm.xlu0 %225, %v196
        %v227 = vpop.permute.xlu0 %226
        %230 = vset.pattern.permute.xlu0 0
        %231 = vperm.xlu0 %230, %v197
        %v232 = vpop.permute.xlu0 %231
        %235 = vset.pattern.permute.xlu0 0
        %236 = vperm.xlu0 %235, %v198
        %v237 = vpop.permute.xlu0 %236
        %vm239 = vcmask 23552
        %240 = vst.msk [vmem:[%s140 + $0x1] sm:$0xff] %vm239, %v202
        %241 = vst.msk [vmem:[%s140 + $0x9] sm:$0xff] %vm239, %v207
        %242 = vst.msk [vmem:[%s140 + $0x19] sm:$0xff] %vm239, %v212
        %243 = vst.msk [vmem:[%s140 + $0x21] sm:$0xff] %vm239, %v217
        %244 = vst.msk [vmem:[%s140 + $0x31] sm:$0xff] %vm239, %v222
        %245 = vst.msk [vmem:[%s140 + $0x39] sm:$0xff] %vm239, %v227
        %246 = vst.msk [vmem:[%s140 + $0x49] sm:$0xff] %vm239, %v232
        %247 = vst.msk [vmem:[%s140 + $0x51] sm:$0xff] %vm239, %v237
        %v248 = vld [vmem:[%s114] sm:$0xff]
        %v249 = vld [vmem:[%s114 + $0x8] sm:$0xff]
        %v250 = vld [vmem:[%s114 + $0x10] sm:$0xff]
        %v251 = vld [vmem:[%s114 + $0x18] sm:$0xff]
        %v252 = vld [vmem:[%s114 + $0x20] sm:$0xff]
        %v253 = vld [vmem:[%s114 + $0x28] sm:$0xff]
        %v254 = vld [vmem:[%s114 + $0x30] sm:$0xff]
        %v255 = vld [vmem:[%s114 + $0x38] sm:$0xff]
        %257 = vset.pattern.permute.xlu0 15
        %258 = vperm.xlu0 %257, %v248
        %v259 = vpop.permute.xlu0 %258
        %262 = vset.pattern.permute.xlu0 15
        %263 = vperm.xlu0 %262, %v249
        %v264 = vpop.permute.xlu0 %263
        %267 = vset.pattern.permute.xlu0 15
        %268 = vperm.xlu0 %267, %v250
        %v269 = vpop.permute.xlu0 %268
        %272 = vset.pattern.permute.xlu0 15
        %273 = vperm.xlu0 %272, %v251
        %v274 = vpop.permute.xlu0 %273
        %277 = vset.pattern.permute.xlu0 15
        %278 = vperm.xlu0 %277, %v252
        %v279 = vpop.permute.xlu0 %278
        %282 = vset.pattern.permute.xlu0 15
        %283 = vperm.xlu0 %282, %v253
        %v284 = vpop.permute.xlu0 %283
        %287 = vset.pattern.permute.xlu0 15
        %288 = vperm.xlu0 %287, %v254
        %v289 = vpop.permute.xlu0 %288
        %292 = vset.pattern.permute.xlu0 15
        %293 = vperm.xlu0 %292, %v255
        %v294 = vpop.permute.xlu0 %293
        %vm296 = vcmask 171160
        %297 = vst.msk [vmem:[%s140 + $0x1] sm:$0xff] %vm296, %v259
        %298 = vst.msk [vmem:[%s140 + $0x9] sm:$0xff] %vm296, %v264
        %299 = vst.msk [vmem:[%s140 + $0x19] sm:$0xff] %vm296, %v269
        %300 = vst.msk [vmem:[%s140 + $0x21] sm:$0xff] %vm296, %v274
        %301 = vst.msk [vmem:[%s140 + $0x31] sm:$0xff] %vm296, %v279
        %302 = vst.msk [vmem:[%s140 + $0x39] sm:$0xff] %vm296, %v284
        %303 = vst.msk [vmem:[%s140 + $0x49] sm:$0xff] %vm296, %v289
        %304 = vst.msk [vmem:[%s140 + $0x51] sm:$0xff] %vm296, %v294
        %v305 = vld [vmem:[%s140 + $0x1] sm:$0x1]
        %v306 = vld [vmem:[%s140 + $0x19] sm:$0x1]
        %v307 = vld [vmem:[%s140 + $0x31] sm:$0x1]
        %v308 = vld [vmem:[%s140 + $0x49] sm:$0x1]
        %vm309 = vcmask 163840
        %310 = vst.msk [vmem:[%s140] sm:$0x1] %vm309, %v305
        %311 = vst.msk [vmem:[%s140 + $0x18] sm:$0x1] %vm309, %v306
        %312 = vst.msk [vmem:[%s140 + $0x30] sm:$0x1] %vm309, %v307
        %313 = vst.msk [vmem:[%s140 + $0x48] sm:$0x1] %vm309, %v308
        %v314 = vld [vmem:[%s140 + $0x10] sm:$0x1]
        %v315 = vld [vmem:[%s140 + $0x28] sm:$0x1]
        %v316 = vld [vmem:[%s140 + $0x40] sm:$0x1]
        %v317 = vld [vmem:[%s140 + $0x58] sm:$0x1]
        %v318 = vlaneseq
        %v319 = vshrl.u32 %v318, 7
        %v320 = vsub.s32 0, %v319
        %v321 = vrot.slane %v314, %v320
        %v322 = vlaneseq
        %v323 = vshrl.u32 %v322, 7
        %v324 = vsub.s32 0, %v323
        %v325 = vrot.slane %v315, %v324
        %v326 = vlaneseq
        %v327 = vshrl.u32 %v326, 7
        %v328 = vsub.s32 0, %v327
        %v329 = vrot.slane %v316, %v328
        %v330 = vlaneseq
        %v331 = vshrl.u32 %v330, 7
        %v332 = vsub.s32 0, %v331
        %v333 = vrot.slane %v317, %v332
        %vm334 = vcmask 166912
        %335 = vst.msk [vmem:[%s140 + $0x11] sm:$0xf] %vm334, %v321
        %336 = vst.msk [vmem:[%s140 + $0x29] sm:$0xf] %vm334, %v325
        %337 = vst.msk [vmem:[%s140 + $0x41] sm:$0xf] %vm334, %v329
        %338 = vst.msk [vmem:[%s140 + $0x59] sm:$0xf] %vm334, %v333
        %s339 = smul.u32 4, %s15
        %p340 = scmp.lt.s32.totalorder %s339, 7
        %s341 = scalar_select %p340, %s339, 7
        %s342 = smul.addr %s341, 3
        %s343 = smul.addr %s342, 8
        %s344 = scalar_lea.vmem %s1, %s343
        // Predicated region
        $region29: #{tpu_custom_call.1} parent=23 // pred_check
          %p345 = pneg %p59
        $region30: #{tpu_custom_call.1} parent=23 // pred_check_branch
          %347 = sbr.rel (%p345) target = $region32
        $region31: #{tpu_custom_call.1} parent=23 // pred_region
          %s348 = smul.u32 4, %s15
        $region32: #{tpu_custom_call.1} parent=23 // pred_fallthru
          _
      $region24: #{tpu_custom_call.1} parent=5 // pred_fallthru
        _
      %p349 = scmp.le.s32.totalorder 2, %s10
      // Predicated region
      $region33: #{tpu_custom_call.1} parent=5 // pred_check
        %p350 = pneg %p349
      $region34: #{tpu_custom_call.1} parent=5 // pred_check_branch
        %352 = sbr.rel (%p350) target = $region36
      $region35: #{tpu_custom_call.1} parent=5 // pred_region
        %s353 = ssub.s32 %s10, 2
        // Predicated region
        $region37: #{tpu_custom_call.1} parent=35 // pred_check
          %p354 = pneg %p65
        $region38: #{tpu_custom_call.1} parent=35 // pred_check_branch
          %356 = sbr.rel (%p354) target = $region40
        $region39: #{tpu_custom_call.1} parent=35 // pred_region
          %s357 = smul.u32 4, %s16
          %p358 = scmp.lt.s32.totalorder %s357, 7
          %s359 = scalar_select %p358, %s357, 7
          %s360 = smul.addr %s359, 3
          %s361 = smul.addr %s360, 8
          %s362 = scalar_lea.vmem %s1, %s361
        $region40: #{tpu_custom_call.1} parent=35 // pred_fallthru
          _
      $region36: #{tpu_custom_call.1} parent=5 // pred_fallthru
        _
    $region6: #{tpu_custom_call.1} parent=1 // loop_footer
      %s14 = sadd.s32 1, %s10
    $region7: #{tpu_custom_call.1} parent=1 // loop_footer_branch
      %9 = sbr.rel target = $region3
    $region8: #{tpu_custom_call.1} parent=1 // loop_exit
      _
    %363 = vsyncpa [#allocation3], 1
    %s364 = scalar_lea.sflag [#allocation3], 1
    %365 = vsyncpa %s364, 1

</llo_original>
